<compile_context>
chip_gen: v7x
topology: tpu7x:2x2x1
jax: 0.10.0
libtpu: 0.0.40
codegen_flags: <defaults>
</compile_context>

<pallas_src>
import functools

import jax
import jax.numpy as jnp
from jax.experimental import pallas as pl
from jax.experimental.pallas import tpu as pltpu


# ----------------------------------------------------------------------------
# Small path: whole problem in one VMEM block, no grid (no pipeline overhead).
# ----------------------------------------------------------------------------
def _custom_loss_single_kernel(pred_ref, rew_ref, out_ref):
    rew = rew_ref[...].astype(jnp.float32)
    # Numerically-stable softmax along the last axis.
    m = jnp.max(rew, axis=-1, keepdims=True)
    e = jnp.exp(rew - m)
    target = e * pl.reciprocal(jnp.sum(e, axis=-1, keepdims=True), approx=False)
    diff = pred_ref[...].astype(jnp.float32) - target
    out_ref[0, 0] = jnp.mean(diff * diff)


# ----------------------------------------------------------------------------
# Large path: stream row tiles, emit one partial sum of squared diffs per tile.
# ----------------------------------------------------------------------------
def _custom_loss_tiled_kernel(pred_ref, rew_ref, partial_ref, *, true_b, tile_b):
    i = pl.program_id(0)
    rew = rew_ref[...].astype(jnp.float32)
    m = jnp.max(rew, axis=-1, keepdims=True)
    e = jnp.exp(rew - m)
    target = e * pl.reciprocal(jnp.sum(e, axis=-1, keepdims=True), approx=False)
    diff = pred_ref[...].astype(jnp.float32) - target
    sq = diff * diff
    # Mask rows of the (possibly ragged) last tile that lie beyond the real B:
    # their contents are padding/undefined and must not touch the reduction.
    row_ids = jax.lax.broadcasted_iota(jnp.int32, sq.shape, 0) + i * tile_b
    sq = jnp.where(row_ids < true_b, sq, 0.0)
    # One scalar partial sum per grid step, written to its own SMEM slot.
    partial_ref[i] = jnp.sum(sq)


def custom_loss(predicted_rewards, all_rewards):
    assert predicted_rewards.shape == all_rewards.shape
    B, N = predicted_rewards.shape

    # Small problems: single block, gridless call (launch-overhead bound anyway).
    small = (2 * B * N * 4 <= 2 * 1024 * 1024) and (B <= 256)
    if small:
        out = pl.pallas_call(
            _custom_loss_single_kernel,
            out_shape=jax.ShapeDtypeStruct((1, 1), jnp.float32),
            in_specs=[
                pl.BlockSpec(memory_space=pltpu.VMEM),
                pl.BlockSpec(memory_space=pltpu.VMEM),
            ],
            out_specs=pl.BlockSpec(memory_space=pltpu.SMEM),
        )(predicted_rewards, all_rewards)
        return out[0, 0]

    # Row-tiled streaming path.
    # Tile budget: 2 inputs x 2 pipeline buffers x (tile_b x N) f32 <= 16 MiB,
    # which fits the 32 MiB scoped-VMEM default on v5e/v6e and v7x's 64 MiB VMEM.
    itemsize = 4
    budget_bytes = 16 * 1024 * 1024
    tile_b = budget_bytes // (2 * 2 * N * itemsize)
    tile_b = max(8, min(512, (tile_b // 8) * 8))          # (8,128)-legal sublane count
    tile_b = min(tile_b, ((B + 7) // 8) * 8)               # don't exceed (padded) B
    num_tiles = pl.cdiv(B, tile_b)

    partials = pl.pallas_call(
        functools.partial(_custom_loss_tiled_kernel, true_b=B, tile_b=tile_b),
        out_shape=jax.ShapeDtypeStruct((num_tiles,), jnp.float32),
        grid=(num_tiles,),
        in_specs=[
            pl.BlockSpec((tile_b, N), lambda i: (i, 0)),
            pl.BlockSpec((tile_b, N), lambda i: (i, 0)),
        ],
        # Unblocked SMEM output: each grid step writes its own slot (no serial
        # accumulation dependence).  Kept "arbitrary" because the shared SMEM
        # result buffer is resident across the grid.
        out_specs=pl.BlockSpec(memory_space=pltpu.SMEM),
        compiler_params=pltpu.CompilerParams(
            dimension_semantics=("arbitrary",),
        ),
    )(predicted_rewards, all_rewards)

    # Finish the mean with the true element count (never the padded one).
    return jnp.sum(partials) / jnp.float32(B * N)


def _reference_loss(predicted_rewards, all_rewards):
    target = jax.nn.softmax(all_rewards.astype(jnp.float32), axis=-1)
    return jnp.mean((predicted_rewards.astype(jnp.float32) - target) ** 2)


if __name__ == "__main__":
    key = jax.random.PRNGKey(0)
    k1, k2, k3, k4 = jax.random.split(key, 4)

    # --- Small-shape path (gridless single block): batch=4, reward-dim=128 ---
    B, N = 4, 128
    predicted_rewards = jax.random.normal(k1, (B, N), dtype=jnp.float32)
    all_rewards = jax.random.normal(k2, (B, N), dtype=jnp.float32)
    loss = jax.block_until_ready(custom_loss(predicted_rewards, all_rewards))
    ref = _reference_loss(predicted_rewards, all_rewards)
    assert jnp.allclose(loss, ref, rtol=1e-5, atol=1e-6), (loss, ref)

    # --- Tiled path (ragged last tile exercises masking): batch=600, dim=256 ---
    B2, N2 = 600, 256
    pred2 = jax.random.normal(k3, (B2, N2), dtype=jnp.float32)
    rew2 = jax.random.normal(k4, (B2, N2), dtype=jnp.float32)
    loss2 = jax.block_until_ready(custom_loss(pred2, rew2))
    ref2 = _reference_loss(pred2, rew2)
    assert jnp.allclose(loss2, ref2, rtol=1e-5, atol=1e-6), (loss2, ref2)

    print("KERNEL_OK")
</pallas_src>

<mosaic_0001>
module attributes {stable_mosaic.version = 11 : i64} {
  func.func @_custom_loss_single_kernel(%arg0: memref<4x128xf32, #tpu.memory_space<vmem>>, %arg1: memref<4x128xf32, #tpu.memory_space<vmem>>, %arg2: memref<1x1xf32, #tpu.memory_space<smem>>) attributes {dimension_semantics = [], scalar_prefetch = 0 : i64, scratch_operands = 0 : i64, tpu.core_type = #tpu.core_type<tc>} {
    %c0 = arith.constant 0 : index
    %c0_0 = arith.constant 0 : index
    %0 = vector.load %arg1[%c0, %c0_0] : memref<4x128xf32, #tpu.memory_space<vmem>>, vector<4x128xf32>
    %cst = arith.constant dense<0xFF800000> : vector<4xf32>
    %1 = vector.multi_reduction <maximumf>, %0, %cst [1] : vector<4x128xf32> to vector<4xf32>
    %2 = vector.shape_cast %1 : vector<4xf32> to vector<4x1xf32>
    %3 = vector.broadcast %2 : vector<4x1xf32> to vector<4x128xf32>
    %4 = arith.subf %0, %3 : vector<4x128xf32>
    %5 = math.exp %4 : vector<4x128xf32>
    %cst_1 = arith.constant dense<0.000000e+00> : vector<4xf32>
    %6 = vector.multi_reduction <add>, %5, %cst_1 [1] : vector<4x128xf32> to vector<4xf32>
    %7 = vector.shape_cast %6 : vector<4xf32> to vector<4x1xf32>
    %8 = tpu.reciprocal %7 : vector<4x1xf32> -> vector<4x1xf32>
    %9 = vector.broadcast %8 : vector<4x1xf32> to vector<4x128xf32>
    %10 = arith.mulf %5, %9 : vector<4x128xf32>
    %c0_2 = arith.constant 0 : index
    %c0_3 = arith.constant 0 : index
    %11 = vector.load %arg0[%c0_2, %c0_3] : memref<4x128xf32, #tpu.memory_space<vmem>>, vector<4x128xf32>
    %12 = arith.subf %11, %10 : vector<4x128xf32>
    %13 = arith.mulf %12, %12 : vector<4x128xf32>
    %14 = vector.shape_cast %13 : vector<4x128xf32> to vector<1x4x128xf32>
    %cst_4 = arith.constant dense<0.000000e+00> : vector<1xf32>
    %15 = vector.multi_reduction <add>, %14, %cst_4 [1, 2] : vector<1x4x128xf32> to vector<1xf32>
    %16 = vector.shape_cast %15 : vector<1xf32> to vector<1x1x1xf32>
    %17 = vector.extract %16[0, 0, 0] : f32 from vector<1x1x1xf32>
    %cst_5 = arith.constant 5.120000e+02 : f32
    %18 = arith.divf %17, %cst_5 : f32
    %c0_6 = arith.constant 0 : index
    %c0_7 = arith.constant 0 : index
    %19 = memref.load %arg2[%c0_6, %c0_7] : memref<1x1xf32, #tpu.memory_space<smem>>
    memref.store %18, %arg2[%c0_6, %c0_7] : memref<1x1xf32, #tpu.memory_space<smem>>
    return
  }
}

</mosaic_0001>

<llo_original>
// kernel: tpu_custom_call.1
$region0: #{tpu_custom_call.1}
  #allocation0 [shape = 'u32[]', space=smem, size = 0x4, offset = 0x4, fixed_abs, tag = 'smem constant byte address 0x4 - core index']
  #allocation1 [shape = 'u32[144,128]{1,0:T(1,128)}', space=vmem, size = 0x12000, scoped, tag = 'internal scratch']
  %s0 = inlined_call_operand.hbm [shape: f32[4,128], index: 0, kind: input, shape index: {}]
  %s1 = inlined_call_operand.hbm [shape: f32[4,128], index: 1, kind: input, shape index: {}]
  %s2 = inlined_call_operand.hbm [shape: f32[1,1], index: 2, kind: output, shape index: {}]
  %s3 = sld [smem:[#allocation0]]
  $region26: #{tpu_custom_call.1} parent=0
    _
  %s5 = ssub.s32 1, %s3
  %s6 = scalar_select 0, %s5, %s3
  $region1: #{tpu_custom_call.1} parent=0
    #allocation2 [shape = 'u8[2048]{0}', space=vmem, size = 0x800, scoped, tag = 'input window, operand 0, single buffered']
    #allocation3 [shape = 's32[1]{0}', space=sflag, size = 0x4, scoped, tag = 'scoped memory for tpu_custom_call.1']
    #allocation4 [shape = 's32[1]{0}', space=sflag, size = 0x4, scoped, tag = 'scoped memory for tpu_custom_call.1']
    #allocation5 [shape = 'u8[2048]{0}', space=vmem, size = 0x800, scoped, tag = 'input window, operand 1, single buffered']
    #allocation6 [shape = 's32[1]{0}', space=sflag, size = 0x4, scoped, tag = 'scoped memory for tpu_custom_call.1']
    #allocation7 [shape = 'u8[512]{0}', space=smem, size = 0x200, scoped, tag = 'output window, operand 0, single buffered']
    %7 = vsyncpa [#allocation3], 0
    %8 = vsyncpa [#allocation6], 0
    %9 = vsyncpa [#allocation4], 0
    // Predicated region
    $region2: #{tpu_custom_call.1} parent=1 // pred_check
      _
    $region3: #{tpu_custom_call.1} parent=1 // pred_check_branch
      %11 = sbr.rel (0) target = $region5
    $region4: #{tpu_custom_call.1} parent=1 // pred_region
      %s13 = ssub.s32 64, 64
      %14 = vsyncadd [#allocation3], %s13
      %s16 = sshll.u32 [#allocation2], 4
      %s17 = int_to_ptr.vmem [resolvable:$true] %s16
      %19 = dma.hbm_to_vmem [thread:$0]  %s0, 64, %s17, [#allocation3]
    $region5: #{tpu_custom_call.1} parent=1 // pred_fallthru
      _
    // Predicated region
    $region6: #{tpu_custom_call.1} parent=1 // pred_check
      _
    $region7: #{tpu_custom_call.1} parent=1 // pred_check_branch
      %21 = sbr.rel (0) target = $region9
    $region8: #{tpu_custom_call.1} parent=1 // pred_region
      %s23 = ssub.s32 64, 64
      %24 = vsyncadd [#allocation6], %s23
      %s26 = sshll.u32 [#allocation5], 4
      %s27 = int_to_ptr.vmem [resolvable:$true] %s26
      %29 = dma.hbm_to_vmem [thread:$0]  %s1, 64, %s27, [#allocation6]
    $region9: #{tpu_custom_call.1} parent=1 // pred_fallthru
      _
    // Predicated region
    $region10: #{tpu_custom_call.1} parent=1 // pred_check
      _
    $region11: #{tpu_custom_call.1} parent=1 // pred_check_branch
      %31 = sbr.rel (0) target = $region13
    $region12: #{tpu_custom_call.1} parent=1 // pred_region
      %32 = dma.done [#allocation3], 64
    $region13: #{tpu_custom_call.1} parent=1 // pred_fallthru
      _
    // Predicated region
    $region14: #{tpu_custom_call.1} parent=1 // pred_check
      _
    $region15: #{tpu_custom_call.1} parent=1 // pred_check_branch
      %34 = sbr.rel (0) target = $region17
    $region16: #{tpu_custom_call.1} parent=1 // pred_region
      %35 = dma.done [#allocation6], 64
    $region17: #{tpu_custom_call.1} parent=1 // pred_fallthru
      _
    %v36 = vld [vmem:[#allocation5] sm:$0xf]
    %vm37 = vcmask 1043456
    %v38 = vsel %vm37, %v36, -inf
    %39 = vmax.xlane.f32.xlu0 %v38
    %v40 = vpop.xlane.xlu0 %39
    %v41 = vsub.f32 %v36, %v40
    %v42 = vmul.f32 %v41, 1.442695
    %v43 = vpow.pop %v42
    %v44 = vsel %vm37, %v43, 0.0
    %45 = vadd.xlane.f32.xlu0 %v44
    %v46 = vpop.xlane.xlu0 %45
    %v47 = vrcp.pop %v46
    %v48 = vmul.f32 %v43, %v47
    %v49 = vld [vmem:[#allocation2] sm:$0xf]
    %v50 = vsub.f32 %v49, %v48
    %v51 = vmul.f32 %v50, %v50
    %v52 = vsel %vm37, %v51, 0.0
    %53 = vadd.xlane.f32.xlu0 %v52
    %v54 = vpop.xlane.xlu0 %53
    %v55 = vrot.slane %v54, 4
    %v56 = vadd.f32 %v54, %v55
    %v57 = vrot.slane %v56, 2
    %v58 = vadd.f32 %v56, %v57
    %v59 = vrot.slane %v58, 1
    %v60 = vadd.f32 %v58, %v59
    %s61 = vtos %v60
    %v62 = vrcp.pop 512.0
    %s63 = vtos %v62
    %s64 = smul.f32 %s61, %s63
    %s65 = scalar_lea.smem [#allocation7], 0
    %66 = sst [smem:[%s65]] %s64
    // Predicated region
    $region18: #{tpu_custom_call.1} parent=1 // pred_check
      _
    $region19: #{tpu_custom_call.1} parent=1 // pred_check_branch
      %68 = sbr.rel (0) target = $region21
    $region20: #{tpu_custom_call.1} parent=1 // pred_region
      %s70 = ssub.s32 16, 16
      %71 = vsyncadd [#allocation4], %s70
      %74 = dma.smem_to_hbm [#allocation7], 16, %s2, [#allocation4]
    $region21: #{tpu_custom_call.1} parent=1 // pred_fallthru
      _
    // Predicated region
    $region22: #{tpu_custom_call.1} parent=1 // pred_check
      _
    $region23: #{tpu_custom_call.1} parent=1 // pred_check_branch
      %76 = sbr.rel (0) target = $region25
    $region24: #{tpu_custom_call.1} parent=1 // pred_region
      %77 = dma.done [#allocation4], 16
    $region25: #{tpu_custom_call.1} parent=1 // pred_fallthru
      _
    %78 = sfence
    %79 = vsyncpa [#allocation3], 1
    %80 = vsyncpa [#allocation6], 1
    %81 = vsyncpa [#allocation4], 1

</llo_original>
